<compile_context>
chip_gen: v6e
topology: v6e:2x2x1
jax: 0.10.0
libtpu: 0.0.40
codegen_flags: <defaults>
</compile_context>

<pallas_src>
import jax
import jax.numpy as jnp
from jax import lax
from jax.experimental import pallas as pl
from jax.experimental.pallas import tpu as pltpu


# ----------------------------------------------------------------------------
# Fused Pallas kernel: encoder recurrence -> decoder recurrence
# ----------------------------------------------------------------------------
def _lstm_ae_kernel(xp_ref, ew_hh_ref, dw_ih_ref, dw_hh_ref, db_ref, out_ref):
    """One grid step handles one batch tile end-to-end.

    xp_ref:   (T, bb, 4H)  pre-projected encoder inputs (x @ W_ih + b), f32
    ew_hh_ref:(H, 4H)      encoder hidden-to-hidden weights (gate order i,f,g,o)
    dw_ih_ref:(H, 4D)      decoder input-to-hidden weights
    dw_hh_ref:(D, 4D)      decoder hidden-to-hidden weights
    db_ref:   (1, 4D)      decoder combined bias (b_ih + b_hh), f32
    out_ref:  (T, bb, D)   decoder hidden states (time-major), written per step
                           into the resident VMEM block, flushed to HBM once.
    """
    T, bb, _ = xp_ref.shape
    H = ew_hh_ref.shape[0]
    D = dw_hh_ref.shape[0]

    # Hoist weight loads out of the recurrences.
    w_hh_e = ew_hh_ref[...]
    w_hh_d = dw_hh_ref[...]

    # ---------------- encoder recurrence (carries h, c as loop values) -------
    def enc_step(t, carry):
        h, c = carry
        gates = (jnp.dot(h.astype(w_hh_e.dtype), w_hh_e,
                         preferred_element_type=jnp.float32)
                 + xp_ref[t])                             # (bb, 4H)
        i_f = jax.nn.sigmoid(gates[:, :2 * H])            # contiguous [i|f]
        i = i_f[:, :H]
        f = i_f[:, H:]
        g = jnp.tanh(gates[:, 2 * H:3 * H])
        o = jax.nn.sigmoid(gates[:, 3 * H:])
        c = f * c + i * g
        h = o * jnp.tanh(c)
        return h, c

    h0 = jnp.zeros((bb, H), jnp.float32)
    c0 = jnp.zeros((bb, H), jnp.float32)
    h_enc, _ = lax.fori_loop(0, T, enc_step, (h0, c0))

    # ---------------- decoder: constant input -> project it ONCE -------------
    dxp = (jnp.dot(h_enc.astype(dw_ih_ref.dtype), dw_ih_ref[...],
                   preferred_element_type=jnp.float32)
           + db_ref[...])                                 # (bb, 4D)

    def dec_step(t, carry):
        h, c = carry
        gates = (jnp.dot(h.astype(w_hh_d.dtype), w_hh_d,
                         preferred_element_type=jnp.float32)
                 + dxp)                                   # (bb, 4D)
        i_f = jax.nn.sigmoid(gates[:, :2 * D])
        i = i_f[:, :D]
        f = i_f[:, D:]
        g = jnp.tanh(gates[:, 2 * D:3 * D])
        o = jax.nn.sigmoid(gates[:, 3 * D:])
        c = f * c + i * g
        h = o * jnp.tanh(c)
        out_ref[t] = h.astype(out_ref.dtype)              # leading-dim dyn store
        return h, c

    hd0 = jnp.zeros((bb, D), jnp.float32)
    cd0 = jnp.zeros((bb, D), jnp.float32)
    lax.fori_loop(0, T, dec_step, (hd0, cd0))


# ----------------------------------------------------------------------------
# Wrapper
# ----------------------------------------------------------------------------
def lstm_autoencoder_pallas(x, params):
    """x: (B, T, input_dim) float32, batch_first like the PyTorch module."""
    B, T, D = x.shape
    H = params["enc_w_hh"].shape[0]

    # Batch tile: sole ("parallel") grid axis. block_b == B (equal to full dim)
    # or 128 (multiple of 8), so the BlockSpec tiling constraint always holds.
    block_b = min(B, 128)

    # ---- hoisted encoder input projection (one big matmul, all timesteps) ----
    # Produces time-major (T, B, 4H); bias folded in. Done by XLA as a pre-pass
    # so the in-kernel recurrence only does h @ W_hh per step.
    xp = (jnp.einsum("btd,dg->tbg", x, params["enc_w_ih"],
                     preferred_element_type=jnp.float32)
          + params["enc_b"]).astype(jnp.float32)          # (T, B, 4H)

    # TODO(synk): for very long sequences, tile the T axis (emit_pipeline) so
    # the xp / out blocks stay within the scoped VMEM limit; at these sizes the
    # full sequence fits comfortably.
    out_tm = pl.pallas_call(
        _lstm_ae_kernel,
        out_shape=jax.ShapeDtypeStruct((T, B, D), jnp.float32),
        grid=(pl.cdiv(B, block_b),),
        in_specs=[
            pl.BlockSpec((T, block_b, 4 * H), lambda b: (0, b, 0)),  # xp
            pl.BlockSpec((H, 4 * H), lambda b: (0, 0)),              # enc W_hh
            pl.BlockSpec((H, 4 * D), lambda b: (0, 0)),              # dec W_ih
            pl.BlockSpec((D, 4 * D), lambda b: (0, 0)),              # dec W_hh
            pl.BlockSpec((1, 4 * D), lambda b: (0, 0)),              # dec bias
        ],
        out_specs=pl.BlockSpec((T, block_b, D), lambda b: (0, b, 0)),
        compiler_params=pltpu.CompilerParams(
            dimension_semantics=("parallel",)),
    )(xp, params["enc_w_hh"], params["dec_w_ih"], params["dec_w_hh"],
      params["dec_b"])

    return jnp.transpose(out_tm, (1, 0, 2))               # back to (B, T, D)


# ----------------------------------------------------------------------------
# Deterministic parameter init (mimics PyTorch nn.LSTM param shapes:
#   weight_ih_l0: (4H, in), weight_hh_l0: (4H, H), bias_ih/hh: (4H,)).
# Stored transposed for right-multiplication in the kernel; biases summed and
# kept in f32. `dtype` lets weights be stored in bf16 for the bf16 MXU path.
# ----------------------------------------------------------------------------
def init_params(key, input_dim, hidden_dim, dtype=jnp.float32):
    ks = jax.random.split(key, 8)
    k_enc = 1.0 / jnp.sqrt(hidden_dim)
    k_dec = 1.0 / jnp.sqrt(input_dim)

    def u(k, shape, scale):
        return jax.random.uniform(k, shape, jnp.float32, -scale, scale)

    enc_w_ih = u(ks[0], (4 * hidden_dim, input_dim), k_enc)
    enc_w_hh = u(ks[1], (4 * hidden_dim, hidden_dim), k_enc)
    enc_b_ih = u(ks[2], (4 * hidden_dim,), k_enc)
    enc_b_hh = u(ks[3], (4 * hidden_dim,), k_enc)

    dec_w_ih = u(ks[4], (4 * input_dim, hidden_dim), k_dec)
    dec_w_hh = u(ks[5], (4 * input_dim, input_dim), k_dec)
    dec_b_ih = u(ks[6], (4 * input_dim,), k_dec)
    dec_b_hh = u(ks[7], (4 * input_dim,), k_dec)

    return {
        "enc_w_ih": enc_w_ih.T.astype(dtype),              # (D, 4H)
        "enc_w_hh": enc_w_hh.T.astype(dtype),              # (H, 4H)
        "enc_b": (enc_b_ih + enc_b_hh)[None, :],           # (1, 4H) f32
        "dec_w_ih": dec_w_ih.T.astype(dtype),              # (H, 4D)
        "dec_w_hh": dec_w_hh.T.astype(dtype),              # (D, 4D)
        "dec_b": (dec_b_ih + dec_b_hh)[None, :],           # (1, 4D) f32
    }


# ----------------------------------------------------------------------------
# Pure-JAX reference (mirrors PyTorch LSTM equations, gate order i, f, g, o)
# ----------------------------------------------------------------------------
def _lstm_ref(x, w_ih_t, w_hh_t, b, hidden):
    B = x.shape[0]

    def step(carry, x_t):
        h, c = carry
        gates = x_t @ w_ih_t + h @ w_hh_t + b
        i, f, g, o = jnp.split(gates, 4, axis=-1)
        i, f, o = jax.nn.sigmoid(i), jax.nn.sigmoid(f), jax.nn.sigmoid(o)
        g = jnp.tanh(g)
        c = f * c + i * g
        h = o * jnp.tanh(c)
        return (h, c), h

    h0 = jnp.zeros((B, hidden), jnp.float32)
    c0 = jnp.zeros((B, hidden), jnp.float32)
    (h_T, _), hs = lax.scan(step, (h0, c0), jnp.swapaxes(x, 0, 1))
    return jnp.swapaxes(hs, 0, 1), h_T


def lstm_autoencoder_ref(x, params):
    B, T, D = x.shape
    H = params["enc_w_hh"].shape[0]
    _, h = _lstm_ref(x, params["enc_w_ih"].astype(jnp.float32),
                     params["enc_w_hh"].astype(jnp.float32),
                     params["enc_b"][0], H)
    dec_in = jnp.broadcast_to(h[:, None, :], (B, T, H))    # h.repeat/permute
    out, _ = _lstm_ref(dec_in, params["dec_w_ih"].astype(jnp.float32),
                       params["dec_w_hh"].astype(jnp.float32),
                       params["dec_b"][0], D)
    return out


# ----------------------------------------------------------------------------
if __name__ == "__main__":
    key = jax.random.PRNGKey(0)
    B, T, INPUT_DIM, HIDDEN_DIM = 2, 8, 8, 32

    k_x, k_p = jax.random.split(key)
    x = jax.random.normal(k_x, (B, T, INPUT_DIM), dtype=jnp.float32)
    params = init_params(k_p, INPUT_DIM, HIDDEN_DIM)       # f32 weights (exact
                                                           # PyTorch semantics)

    out = jax.jit(lstm_autoencoder_pallas)(x, params)
    out = jax.block_until_ready(out)

    ref = lstm_autoencoder_ref(x, params)
    assert out.shape == (B, T, INPUT_DIM), out.shape
    assert jnp.allclose(out, ref, atol=1e-5, rtol=1e-5), (
        float(jnp.max(jnp.abs(out - ref))))

    print("KERNEL_OK")
</pallas_src>

<mosaic_0001>
module attributes {stable_mosaic.version = 11 : i64} {
  func.func @_lstm_ae_kernel(%arg0: i32, %arg1: memref<8x2x128xf32, #tpu.memory_space<vmem>>, %arg2: memref<32x128xf32, #tpu.memory_space<vmem>>, %arg3: memref<32x32xf32, #tpu.memory_space<vmem>>, %arg4: memref<8x32xf32, #tpu.memory_space<vmem>>, %arg5: memref<1x32xf32, #tpu.memory_space<vmem>>, %arg6: memref<8x2x8xf32, #tpu.memory_space<vmem>>) attributes {dimension_semantics = [#tpu.dimension_semantics<parallel>], iteration_bounds = array<i64: 1>, scalar_prefetch = 0 : i64, scratch_operands = 0 : i64, tpu.core_type = #tpu.core_type<tc>, window_params = [{transform_indices = @transform_0, window_bounds = array<i64: 8, 2, 128>}, {pipeline_mode = #tpu.pipeline_mode<synchronous>, transform_indices = @transform_1, window_bounds = array<i64: 32, 128>}, {pipeline_mode = #tpu.pipeline_mode<synchronous>, transform_indices = @transform_2, window_bounds = array<i64: 32, 32>}, {pipeline_mode = #tpu.pipeline_mode<synchronous>, transform_indices = @transform_3, window_bounds = array<i64: 8, 32>}, {pipeline_mode = #tpu.pipeline_mode<synchronous>, transform_indices = @transform_4, window_bounds = array<i64: 1, 32>}, {transform_indices = @transform_5, window_bounds = array<i64: 8, 2, 8>}]} {
    %c0 = arith.constant 0 : index
    %c0_0 = arith.constant 0 : index
    %0 = vector.load %arg2[%c0, %c0_0] : memref<32x128xf32, #tpu.memory_space<vmem>>, vector<32x128xf32>
    %c0_1 = arith.constant 0 : index
    %c0_2 = arith.constant 0 : index
    %1 = vector.load %arg4[%c0_1, %c0_2] : memref<8x32xf32, #tpu.memory_space<vmem>>, vector<8x32xf32>
    %cst = arith.constant 0.000000e+00 : f32
    %2 = vector.broadcast %cst : f32 to vector<2x32xf32>
    %cst_3 = arith.constant 0.000000e+00 : f32
    %3 = vector.broadcast %cst_3 : f32 to vector<2x32xf32>
    %c0_i32 = arith.constant 0 : i32
    %c8_i32 = arith.constant 8 : i32
    %4 = arith.addi %c0_i32, %c8_i32 : i32
    %c1_i32 = arith.constant 1 : i32
    %5:2 = scf.for %arg7 = %c0_i32 to %4 step %c1_i32 iter_args(%arg8 = %2, %arg9 = %3) -> (vector<2x32xf32>, vector<2x32xf32>)  : i32 {
      %cst_16 = arith.constant dense<0.000000e+00> : vector<2x128xf32>
      %15 = tpu.matmul %arg8, %0, %cst_16 {dimension_numbers = #tpu.dot_dimension_numbers<[1], [0], [0], [1], [0, 0, 1, 1], [], []>} : vector<2x32xf32>, vector<32x128xf32>, vector<2x128xf32> -> vector<2x128xf32>
      %16 = arith.index_cast %arg7 : i32 to index
      %c0_17 = arith.constant 0 : index
      %c0_18 = arith.constant 0 : index
      %17 = vector.load %arg1[%16, %c0_17, %c0_18] : memref<8x2x128xf32, #tpu.memory_space<vmem>>, vector<1x2x128xf32>
      %18 = vector.shape_cast %17 : vector<1x2x128xf32> to vector<2x128xf32>
      %19 = arith.addf %15, %18 : vector<2x128xf32>
      %20 = vector.extract_strided_slice %19 {offsets = [0, 0], sizes = [2, 64], strides = [1, 1]} : vector<2x128xf32> to vector<2x64xf32>
      %21 = arith.negf %20 : vector<2x64xf32>
      %22 = math.exp %21 : vector<2x64xf32>
      %cst_19 = arith.constant 1.000000e+00 : f32
      %23 = vector.broadcast %cst_19 : f32 to vector<2x64xf32>
      %24 = arith.addf %23, %22 : vector<2x64xf32>
      %25 = arith.divf %23, %24 : vector<2x64xf32>
      %26 = vector.extract_strided_slice %25 {offsets = [0, 0], sizes = [2, 32], strides = [1, 1]} : vector<2x64xf32> to vector<2x32xf32>
      %27 = vector.extract_strided_slice %25 {offsets = [0, 32], sizes = [2, 32], strides = [1, 1]} : vector<2x64xf32> to vector<2x32xf32>
      %28 = vector.extract_strided_slice %19 {offsets = [0, 64], sizes = [2, 32], strides = [1, 1]} : vector<2x128xf32> to vector<2x32xf32>
      %29 = math.tanh %28 : vector<2x32xf32>
      %30 = vector.extract_strided_slice %19 {offsets = [0, 96], sizes = [2, 32], strides = [1, 1]} : vector<2x128xf32> to vector<2x32xf32>
      %31 = arith.negf %30 : vector<2x32xf32>
      %32 = math.exp %31 : vector<2x32xf32>
      %cst_20 = arith.constant 1.000000e+00 : f32
      %33 = vector.broadcast %cst_20 : f32 to vector<2x32xf32>
      %34 = arith.addf %33, %32 : vector<2x32xf32>
      %35 = arith.divf %33, %34 : vector<2x32xf32>
      %36 = arith.mulf %27, %arg9 : vector<2x32xf32>
      %37 = arith.mulf %26, %29 : vector<2x32xf32>
      %38 = arith.addf %36, %37 : vector<2x32xf32>
      %39 = math.tanh %38 : vector<2x32xf32>
      %40 = arith.mulf %35, %39 : vector<2x32xf32>
      scf.yield %40, %38 : vector<2x32xf32>, vector<2x32xf32>
    }
    %c8_i32_4 = arith.constant 8 : i32
    %c0_5 = arith.constant 0 : index
    %c0_6 = arith.constant 0 : index
    %6 = vector.load %arg3[%c0_5, %c0_6] : memref<32x32xf32, #tpu.memory_space<vmem>>, vector<32x32xf32>
    %cst_7 = arith.constant dense<0.000000e+00> : vector<2x32xf32>
    %7 = tpu.matmul %5#0, %6, %cst_7 {dimension_numbers = #tpu.dot_dimension_numbers<[1], [0], [0], [1], [0, 0, 1, 1], [], []>} : vector<2x32xf32>, vector<32x32xf32>, vector<2x32xf32> -> vector<2x32xf32>
    %c0_8 = arith.constant 0 : index
    %c0_9 = arith.constant 0 : index
    %8 = vector.load %arg5[%c0_8, %c0_9] : memref<1x32xf32, #tpu.memory_space<vmem>>, vector<1x32xf32>
    %9 = vector.broadcast %8 : vector<1x32xf32> to vector<2x32xf32>
    %10 = arith.addf %7, %9 : vector<2x32xf32>
    %cst_10 = arith.constant 0.000000e+00 : f32
    %11 = vector.broadcast %cst_10 : f32 to vector<2x8xf32>
    %cst_11 = arith.constant 0.000000e+00 : f32
    %12 = vector.broadcast %cst_11 : f32 to vector<2x8xf32>
    %c0_i32_12 = arith.constant 0 : i32
    %c8_i32_13 = arith.constant 8 : i32
    %13 = arith.addi %c0_i32_12, %c8_i32_13 : i32
    %c1_i32_14 = arith.constant 1 : i32
    %14:2 = scf.for %arg7 = %c0_i32_12 to %13 step %c1_i32_14 iter_args(%arg8 = %11, %arg9 = %12) -> (vector<2x8xf32>, vector<2x8xf32>)  : i32 {
      %cst_16 = arith.constant dense<0.000000e+00> : vector<2x32xf32>
      %15 = tpu.matmul %arg8, %1, %cst_16 {dimension_numbers = #tpu.dot_dimension_numbers<[1], [0], [0], [1], [0, 0, 1, 1], [], []>} : vector<2x8xf32>, vector<8x32xf32>, vector<2x32xf32> -> vector<2x32xf32>
      %16 = arith.addf %15, %10 : vector<2x32xf32>
      %17 = vector.extract_strided_slice %16 {offsets = [0, 0], sizes = [2, 16], strides = [1, 1]} : vector<2x32xf32> to vector<2x16xf32>
      %18 = arith.negf %17 : vector<2x16xf32>
      %19 = math.exp %18 : vector<2x16xf32>
      %cst_17 = arith.constant 1.000000e+00 : f32
      %20 = vector.broadcast %cst_17 : f32 to vector<2x16xf32>
      %21 = arith.addf %20, %19 : vector<2x16xf32>
      %22 = arith.divf %20, %21 : vector<2x16xf32>
      %23 = vector.extract_strided_slice %22 {offsets = [0, 0], sizes = [2, 8], strides = [1, 1]} : vector<2x16xf32> to vector<2x8xf32>
      %24 = vector.extract_strided_slice %22 {offsets = [0, 8], sizes = [2, 8], strides = [1, 1]} : vector<2x16xf32> to vector<2x8xf32>
      %25 = vector.extract_strided_slice %16 {offsets = [0, 16], sizes = [2, 8], strides = [1, 1]} : vector<2x32xf32> to vector<2x8xf32>
      %26 = math.tanh %25 : vector<2x8xf32>
      %27 = vector.extract_strided_slice %16 {offsets = [0, 24], sizes = [2, 8], strides = [1, 1]} : vector<2x32xf32> to vector<2x8xf32>
      %28 = arith.negf %27 : vector<2x8xf32>
      %29 = math.exp %28 : vector<2x8xf32>
      %cst_18 = arith.constant 1.000000e+00 : f32
      %30 = vector.broadcast %cst_18 : f32 to vector<2x8xf32>
      %31 = arith.addf %30, %29 : vector<2x8xf32>
      %32 = arith.divf %30, %31 : vector<2x8xf32>
      %33 = arith.mulf %24, %arg9 : vector<2x8xf32>
      %34 = arith.mulf %23, %26 : vector<2x8xf32>
      %35 = arith.addf %33, %34 : vector<2x8xf32>
      %36 = math.tanh %35 : vector<2x8xf32>
      %37 = arith.mulf %32, %36 : vector<2x8xf32>
      %38 = arith.index_cast %arg7 : i32 to index
      %c0_19 = arith.constant 0 : index
      %c0_20 = arith.constant 0 : index
      %39 = vector.load %arg6[%38, %c0_19, %c0_20] : memref<8x2x8xf32, #tpu.memory_space<vmem>>, vector<1x2x8xf32>
      %40 = vector.shape_cast %39 : vector<1x2x8xf32> to vector<2x8xf32>
      %41 = vector.shape_cast %37 : vector<2x8xf32> to vector<1x2x8xf32>
      tpu.vector_store %arg6[%38, %c0_19, %c0_20], %41 {strides = array<i32>} : memref<8x2x8xf32, #tpu.memory_space<vmem>>, vector<1x2x8xf32>,
      scf.yield %37, %35 : vector<2x8xf32>, vector<2x8xf32>
    }
    %c8_i32_15 = arith.constant 8 : i32
    return
  }
  func.func @transform_0(%arg0: i32) -> (i32, i32, i32) {
    %c0_i32 = arith.constant 0 : i32
    %c0_i32_0 = arith.constant 0 : i32
    %c0_i32_1 = arith.constant 0 : i32
    return %c0_i32, %arg0, %c0_i32_0 : i32, i32, i32
  }
  func.func @transform_1(%arg0: i32) -> (i32, i32) {
    %c0_i32 = arith.constant 0 : i32
    %c0_i32_0 = arith.constant 0 : i32
    %c0_i32_1 = arith.constant 0 : i32
    return %c0_i32, %c0_i32_0 : i32, i32
  }
  func.func @transform_2(%arg0: i32) -> (i32, i32) {
    %c0_i32 = arith.constant 0 : i32
    %c0_i32_0 = arith.constant 0 : i32
    %c0_i32_1 = arith.constant 0 : i32
    return %c0_i32, %c0_i32_0 : i32, i32
  }
  func.func @transform_3(%arg0: i32) -> (i32, i32) {
    %c0_i32 = arith.constant 0 : i32
    %c0_i32_0 = arith.constant 0 : i32
    %c0_i32_1 = arith.constant 0 : i32
    return %c0_i32, %c0_i32_0 : i32, i32
  }
  func.func @transform_4(%arg0: i32) -> (i32, i32) {
    %c0_i32 = arith.constant 0 : i32
    %c0_i32_0 = arith.constant 0 : i32
    %c0_i32_1 = arith.constant 0 : i32
    return %c0_i32, %c0_i32_0 : i32, i32
  }
  func.func @transform_5(%arg0: i32) -> (i32, i32, i32) {
    %c0_i32 = arith.constant 0 : i32
    %c0_i32_0 = arith.constant 0 : i32
    %c0_i32_1 = arith.constant 0 : i32
    return %c0_i32, %arg0, %c0_i32_0 : i32, i32, i32
  }
}

</mosaic_0001>

<llo_original>
// kernel: lstm_autoencoder_pallas.1
$region0: #{lstm_autoencoder_pallas.1}
  #allocation0 [shape = 'u32[]', space=smem, size = 0x4, offset = 0x4, fixed_abs, tag = 'smem constant byte address 0x4 - core index']
  #allocation1 [shape = 'u32[144,128]{1,0:T(1,128)}', space=vmem, size = 0x12000, scoped, tag = 'internal scratch']
  %s0 = inlined_call_operand.vmem [shape: f32[8,2,128], index: 0, kind: input, shape index: {}]
  %s1 = inlined_call_operand.vmem [shape: f32[32,128], index: 1, kind: input, shape index: {}]
  %s2 = inlined_call_operand.vmem [shape: f32[32,32], index: 2, kind: input, shape index: {}]
  %s3 = inlined_call_operand.vmem [shape: f32[8,32], index: 3, kind: input, shape index: {}]
  %s4 = inlined_call_operand.vmem [shape: f32[1,32], index: 4, kind: input, shape index: {}]
  %s5 = inlined_call_operand.vmem [shape: f32[8,2,8], index: 5, kind: output, shape index: {}]
  %s6 = sld [smem:[#allocation0]]
  $region44: #{lstm_autoencoder_pallas.1} parent=0
    _
  %s8 = ssub.s32 1, %s6
  %s9 = scalar_select 0, %s8, %s6
  // Predicated region
  $region2: #{lstm_autoencoder_pallas.1} parent=0 // pred_check
    _
  $region3: #{lstm_autoencoder_pallas.1} parent=0 // pred_check_branch
    %11 = sbr.rel (0) target = $region5
  $region4: #{lstm_autoencoder_pallas.1} parent=0 // pred_region
    _
  $region5: #{lstm_autoencoder_pallas.1} parent=0 // pred_fallthru
    _
  // Predicated region
  $region6: #{lstm_autoencoder_pallas.1} parent=0 // pred_check
    _
  $region7: #{lstm_autoencoder_pallas.1} parent=0 // pred_check_branch
    %13 = sbr.rel (0) target = $region9
  $region8: #{lstm_autoencoder_pallas.1} parent=0 // pred_region
    _
  $region9: #{lstm_autoencoder_pallas.1} parent=0 // pred_fallthru
    _
  // Predicated region
  $region10: #{lstm_autoencoder_pallas.1} parent=0 // pred_check
    _
  $region11: #{lstm_autoencoder_pallas.1} parent=0 // pred_check_branch
    %15 = sbr.rel (0) target = $region13
  $region12: #{lstm_autoencoder_pallas.1} parent=0 // pred_region
    _
  $region13: #{lstm_autoencoder_pallas.1} parent=0 // pred_fallthru
    _
  // Predicated region
  $region14: #{lstm_autoencoder_pallas.1} parent=0 // pred_check
    _
  $region15: #{lstm_autoencoder_pallas.1} parent=0 // pred_check_branch
    %17 = sbr.rel (0) target = $region17
  $region16: #{lstm_autoencoder_pallas.1} parent=0 // pred_region
    _
  $region17: #{lstm_autoencoder_pallas.1} parent=0 // pred_fallthru
    _
  // Predicated region
  $region18: #{lstm_autoencoder_pallas.1} parent=0 // pred_check
    _
  $region19: #{lstm_autoencoder_pallas.1} parent=0 // pred_check_branch
    %19 = sbr.rel (0) target = $region21
  $region20: #{lstm_autoencoder_pallas.1} parent=0 // pred_region
    _
  $region21: #{lstm_autoencoder_pallas.1} parent=0 // pred_fallthru
    _
  %v20 = vld [vmem:[%s1] sm:$0xff]
  %v21 = vld [vmem:[%s1 + $0x8] sm:$0xff]
  %v22 = vld [vmem:[%s1 + $0x10] sm:$0xff]
  %v23 = vld [vmem:[%s1 + $0x18] sm:$0xff]
  %v24 = vld [vmem:[%s3] sm:$0xff]
  loop: start=0, step=1, limit=8
  $region22: #{lstm_autoencoder_pallas.1} parent=0 // loop_pre_header
    _
  $region23: #{lstm_autoencoder_pallas.1} parent=0 // loop_header
    %s26 = sphi 0, %s30
    %p27 = scmp.ge.s32.totalorder %s26, 8
    %v31 = vphi 0.0, %v135
    %v32 = vphi 0.0, %v129
  $region24: #{lstm_autoencoder_pallas.1} parent=0 // loop_header_branch
    %29 = sbr.rel (%p27) target = $region28
  $region25: #{lstm_autoencoder_pallas.1} parent=0 // loop_body
    %s33 = smul.u32 %s26, 2
    %s34 = scalar_lea.vmem %s0, %s33
    %v35 = vld [vmem:[%s34] sm:$0x3]
    %37 = vrot.lane.b32.xlu0 %v31, 32
    %v38 = vpop.permute.xlu0 %37
    %vm39 = vcmask 261120
    %v40 = vsel %vm39, %v38, 0
    %42 = vmatprep.subr.mxu0 0.0
    %43 = vmatpush1.msra.mxu0 0.0
    %44 = vmatprep.subr.mxu0 0.0
    %45 = vmatpush1.msra.mxu0 0.0
    %46 = vmatprep.subr.mxu0 0.0
    %47 = vmatpush1.msra.mxu0 0.0
    %48 = vmatprep.subr.mxu0 0.0
    %49 = vmatpush1.msra.mxu0 0.0
    %50 = vmatprep.subr.mxu0 0.0
    %51 = vmatpush1.msra.mxu0 0.0
    %52 = vmatprep.subr.mxu0 0.0
    %53 = vmatpush1.msra.mxu0 0.0
    %54 = vmatprep.subr.mxu0 0.0
    %55 = vmatpush1.msra.mxu0 0.0
    %56 = vmatprep.subr.mxu0 0.0
    %57 = vmatpush1.msra.mxu0 0.0
    %58 = vmatprep.subr.mxu0 0.0
    %59 = vmatpush1.msra.mxu0 0.0
    %60 = vmatprep.subr.mxu0 0.0
    %61 = vmatpush1.msra.mxu0 0.0
    %62 = vmatprep.subr.mxu0 0.0
    %63 = vmatpush1.msra.mxu0 0.0
    %64 = vmatprep.subr.mxu0 0.0
    %65 = vmatpush1.msra.mxu0 0.0
    %66 = vmatprep.subr.mxu0 0.0
    %67 = vmatpush1.msra.mxu0 %v23
    %68 = vmatprep.subr.mxu0 0.0
    %69 = vmatpush1.msra.mxu0 %v22
    %70 = vmatprep.subr.mxu0 0.0
    %71 = vmatpush1.msra.mxu0 %v21
    %72 = vmatprep.subr.mxu0 0.0
    %73 = vmatpush1.msra.mxu0 %v20
    %74 = vmatprep.subr.mxu0 0.0
    %75 = vmatpush2.msra.mxu0 0.0
    %76 = vmatprep.subr.mxu0 0.0
    %77 = vmatpush2.msra.mxu0 0.0
    %78 = vmatprep.subr.mxu0 0.0
    %79 = vmatpush2.msra.mxu0 0.0
    %80 = vmatprep.subr.mxu0 0.0
    %81 = vmatpush2.msra.mxu0 0.0
    %82 = vmatprep.subr.mxu0 0.0
    %83 = vmatpush2.msra.mxu0 0.0
    %84 = vmatprep.subr.mxu0 0.0
    %85 = vmatpush2.msra.mxu0 0.0
    %86 = vmatprep.subr.mxu0 0.0
    %87 = vmatpush2.msra.mxu0 0.0
    %88 = vmatprep.subr.mxu0 0.0
    %89 = vmatpush2.msra.mxu0 0.0
    %90 = vmatprep.subr.mxu0 0.0
    %91 = vmatpush2.msra.mxu0 0.0
    %92 = vmatprep.subr.mxu0 0.0
    %93 = vmatpush2.msra.mxu0 0.0
    %94 = vmatprep.subr.mxu0 0.0
    %95 = vmatpush2.msra.mxu0 0.0
    %96 = vmatprep.subr.mxu0 0.0
    %97 = vmatpush2.msra.mxu0 0.0
    %98 = vmatprep.subr.mxu0 0.0
    %99 = vmatpush2.msra.mxu0 0.0
    %100 = vmatprep.subr.mxu0 0.0
    %101 = vmatpush2.msra.mxu0 0.0
    %102 = vmatprep.subr.mxu0 0.0
    %103 = vmatpush2.msra.mxu0 0.0
    %104 = vmatprep.subr.mxu0 0.0
    %105 = vmatpush2.msra.mxu0 0.0
    %106 = vmatprep.mubr.f32.mxu0 0.0
    %107 = vmatmul.mubr.f32.gmra.mxu0 %v40
    %v108 = vpop.f32.mrf.mxu0
    %v109 = vadd.f32 %v35, %v108
    %v110 = vpop.f32.mrf.mxu0
    %111 = vdwg.mxu0
    %v112 = vxor.u32 %v109, 2147483648
    %v113 = vmul.f32 %v112, 1.442695
    %v114 = vpow.pop %v113
    %v115 = vadd.f32 %v114, 1.0
    %v116 = vrcp.pop %v115
    %v117 = vmul.f32 1.0, %v116
    %v118 = vtanh.pop %v109
    %v119 = vmul.f32 %v117, %v32
    %121 = vrot.lane.b32.xlu0 %v118, 64
    %v122 = vpop.permute.xlu0 %121
    %v124 = vmul.f32 %v117, %v122
    %126 = vrot.lane.b32.xlu0 %v124, 32
    %v127 = vpop.permute.xlu0 %126
    %v129 = vadd.f32 %v119, %v127
    %v130 = vtanh.pop %v129
    %132 = vrot.lane.b32.xlu0 %v130, 64
    %v133 = vpop.permute.xlu0 %132
    %v135 = vmul.f32 %v117, %v133
  $region26: #{lstm_autoencoder_pallas.1} parent=0 // loop_footer
    %s30 = sadd.s32 1, %s26
  $region27: #{lstm_autoencoder_pallas.1} parent=0 // loop_footer_branch
    %25 = sbr.rel target = $region23
  $region28: #{lstm_autoencoder_pallas.1} parent=0 // loop_exit
    _
  %v136 = vld [vmem:[%s2] sm:$0xff]
  %v137 = vld [vmem:[%s2 + $0x8] sm:$0xff]
  %v138 = vld [vmem:[%s2 + $0x10] sm:$0xff]
  %v139 = vld [vmem:[%s2 + $0x18] sm:$0xff]
  %v140 = vld [vmem:[%s4] sm:$0x1]
  %v142 = vlaneseq
  %v143 = vshrl.u32 %v142, 7
  %v144 = vsub.s32 0, %v143
  %v145 = vrot.slane %v140, %v144
  %148 = vrot.lane.b32.xlu0 %v31, 32
  %v149 = vpop.permute.xlu0 %148
  %vm150 = vcmask 261120
  %v151 = vsel %vm150, %v149, 0
  %153 = vmatprep.subr.mxu0 0.0
  %154 = vmatpush1.msra.mxu0 0.0
  %155 = vmatprep.subr.mxu0 0.0
  %156 = vmatpush1.msra.mxu0 0.0
  %157 = vmatprep.subr.mxu0 0.0
  %158 = vmatpush1.msra.mxu0 0.0
  %159 = vmatprep.subr.mxu0 0.0
  %160 = vmatpush1.msra.mxu0 0.0
  %161 = vmatprep.subr.mxu0 0.0
  %162 = vmatpush1.msra.mxu0 0.0
  %163 = vmatprep.subr.mxu0 0.0
  %164 = vmatpush1.msra.mxu0 0.0
  %165 = vmatprep.subr.mxu0 0.0
  %166 = vmatpush1.msra.mxu0 0.0
  %167 = vmatprep.subr.mxu0 0.0
  %168 = vmatpush1.msra.mxu0 0.0
  %169 = vmatprep.subr.mxu0 0.0
  %170 = vmatpush1.msra.mxu0 0.0
  %171 = vmatprep.subr.mxu0 0.0
  %172 = vmatpush1.msra.mxu0 0.0
  %173 = vmatprep.subr.mxu0 0.0
  %174 = vmatpush1.msra.mxu0 0.0
  %175 = vmatprep.subr.mxu0 0.0
  %176 = vmatpush1.msra.mxu0 0.0
  %177 = vmatprep.subr.mxu0 0.0
  %178 = vmatpush1.msra.mxu0 %v139
  %179 = vmatprep.subr.mxu0 0.0
  %180 = vmatpush1.msra.mxu0 %v138
  %181 = vmatprep.subr.mxu0 0.0
  %182 = vmatpush1.msra.mxu0 %v137
  %183 = vmatprep.subr.mxu0 0.0
  %184 = vmatpush1.msra.mxu0 %v136
  %185 = vmatprep.subr.mxu0 0.0
  %186 = vmatpush2.msra.mxu0 0.0
  %187 = vmatprep.subr.mxu0 0.0
  %188 = vmatpush2.msra.mxu0 0.0
  %189 = vmatprep.subr.mxu0 0.0
  %190 = vmatpush2.msra.mxu0 0.0
  %191 = vmatprep.subr.mxu0 0.0
  %192 = vmatpush2.msra.mxu0 0.0
  %193 = vmatprep.subr.mxu0 0.0
  %194 = vmatpush2.msra.mxu0 0.0
  %195 = vmatprep.subr.mxu0 0.0
  %196 = vmatpush2.msra.mxu0 0.0
  %197 = vmatprep.subr.mxu0 0.0
  %198 = vmatpush2.msra.mxu0 0.0
  %199 = vmatprep.subr.mxu0 0.0
  %200 = vmatpush2.msra.mxu0 0.0
  %201 = vmatprep.subr.mxu0 0.0
  %202 = vmatpush2.msra.mxu0 0.0
  %203 = vmatprep.subr.mxu0 0.0
  %204 = vmatpush2.msra.mxu0 0.0
  %205 = vmatprep.subr.mxu0 0.0
  %206 = vmatpush2.msra.mxu0 0.0
  %207 = vmatprep.subr.mxu0 0.0
  %208 = vmatpush2.msra.mxu0 0.0
  %209 = vmatprep.subr.mxu0 0.0
  %210 = vmatpush2.msra.mxu0 0.0
  %211 = vmatprep.subr.mxu0 0.0
  %212 = vmatpush2.msra.mxu0 0.0
  %213 = vmatprep.subr.mxu0 0.0
  %214 = vmatpush2.msra.mxu0 0.0
  %215 = vmatprep.subr.mxu0 0.0
  %216 = vmatpush2.msra.mxu0 0.0
  %217 = vmatprep.mubr.f32.mxu0 0.0
  %218 = vmatmul.mubr.f32.gmra.mxu0 %v151
  %v219 = vpop.f32.mrf.mxu0
  %v220 = vadd.f32 %v145, %v219
  %v221 = vpop.f32.mrf.mxu0
  %222 = vdwg.mxu0
  loop: start=0, step=1, limit=8
  $region29: #{lstm_autoencoder_pallas.1} parent=0 // loop_pre_header
    _
  $region30: #{lstm_autoencoder_pallas.1} parent=0 // loop_header
    %s224 = sphi 0, %s228
    %p225 = scmp.ge.s32.totalorder %s224, 8
    %v229 = vphi 0.0, %v330
    %v230 = vphi 0.0, %v324
  $region31: #{lstm_autoencoder_pallas.1} parent=0 // loop_header_branch
    %227 = sbr.rel (%p225) target = $region35
  $region32: #{lstm_autoencoder_pallas.1} parent=0 // loop_body
    %232 = vrot.lane.b32.xlu0 %v229, 104
    %v233 = vpop.permute.xlu0 %232
    %vm234 = vcmask 64512
    %v235 = vsel %vm234, %v233, 0
    %237 = vmatprep.subr.mxu0 0.0
    %238 = vmatpush1.msra.mxu0 0.0
    %239 = vmatprep.subr.mxu0 0.0
    %240 = vmatpush1.msra.mxu0 0.0
    %241 = vmatprep.subr.mxu0 0.0
    %242 = vmatpush1.msra.mxu0 0.0
    %243 = vmatprep.subr.mxu0 0.0
    %244 = vmatpush1.msra.mxu0 0.0
    %245 = vmatprep.subr.mxu0 0.0
    %246 = vmatpush1.msra.mxu0 0.0
    %247 = vmatprep.subr.mxu0 0.0
    %248 = vmatpush1.msra.mxu0 0.0
    %249 = vmatprep.subr.mxu0 0.0
    %250 = vmatpush1.msra.mxu0 0.0
    %251 = vmatprep.subr.mxu0 0.0
    %252 = vmatpush1.msra.mxu0 0.0
    %253 = vmatprep.subr.mxu0 0.0
    %254 = vmatpush1.msra.mxu0 0.0
    %255 = vmatprep.subr.mxu0 0.0
    %256 = vmatpush1.msra.mxu0 0.0
    %257 = vmatprep.subr.mxu0 0.0
    %258 = vmatpush1.msra.mxu0 0.0
    %259 = vmatprep.subr.mxu0 0.0
    %260 = vmatpush1.msra.mxu0 0.0
    %261 = vmatprep.subr.mxu0 0.0
    %262 = vmatpush1.msra.mxu0 0.0
    %263 = vmatprep.subr.mxu0 0.0
    %264 = vmatpush1.msra.mxu0 0.0
    %265 = vmatprep.subr.mxu0 0.0
    %266 = vmatpush1.msra.mxu0 0.0
    %267 = vmatprep.subr.mxu0 0.0
    %268 = vmatpush1.msra.mxu0 %v24
    %269 = vmatprep.subr.mxu0 0.0
    %270 = vmatpush2.msra.mxu0 0.0
    %271 = vmatprep.subr.mxu0 0.0
    %272 = vmatpush2.msra.mxu0 0.0
    %273 = vmatprep.subr.mxu0 0.0
    %274 = vmatpush2.msra.mxu0 0.0
    %275 = vmatprep.subr.mxu0 0.0
    %276 = vmatpush2.msra.mxu0 0.0
    %277 = vmatprep.subr.mxu0 0.0
    %278 = vmatpush2.msra.mxu0 0.0
    %279 = vmatprep.subr.mxu0 0.0
    %280 = vmatpush2.msra.mxu0 0.0
    %281 = vmatprep.subr.mxu0 0.0
    %282 = vmatpush2.msra.mxu0 0.0
    %283 = vmatprep.subr.mxu0 0.0
    %284 = vmatpush2.msra.mxu0 0.0
    %285 = vmatprep.subr.mxu0 0.0
    %286 = vmatpush2.msra.mxu0 0.0
    %287 = vmatprep.subr.mxu0 0.0
    %288 = vmatpush2.msra.mxu0 0.0
    %289 = vmatprep.subr.mxu0 0.0
    %290 = vmatpush2.msra.mxu0 0.0
    %291 = vmatprep.subr.mxu0 0.0
    %292 = vmatpush2.msra.mxu0 0.0
    %293 = vmatprep.subr.mxu0 0.0
    %294 = vmatpush2.msra.mxu0 0.0
    %295 = vmatprep.subr.mxu0 0.0
    %296 = vmatpush2.msra.mxu0 0.0
    %297 = vmatprep.subr.mxu0 0.0
    %298 = vmatpush2.msra.mxu0 0.0
    %299 = vmatprep.subr.mxu0 0.0
    %300 = vmatpush2.msra.mxu0 0.0
    %301 = vmatprep.mubr.f32.mxu0 0.0
    %302 = vmatmul.mubr.f32.gmra.mxu0 %v235
    %v303 = vpop.f32.mrf.mxu0
    %v304 = vadd.f32 %v220, %v303
    %v305 = vpop.f32.mrf.mxu0
    %306 = vdwg.mxu0
    %v307 = vxor.u32 %v304, 2147483648
    %v308 = vmul.f32 %v307, 1.442695
    %v309 = vpow.pop %v308
    %v310 = vadd.f32 %v309, 1.0
    %v311 = vrcp.pop %v310
    %v312 = vmul.f32 1.0, %v311
    %v313 = vtanh.pop %v304
    %v314 = vmul.f32 %v312, %v230
    %316 = vrot.lane.b32.xlu0 %v313, 112
    %v317 = vpop.permute.xlu0 %316
    %v319 = vmul.f32 %v312, %v317
    %321 = vrot.lane.b32.xlu0 %v319, 8
    %v322 = vpop.permute.xlu0 %321
    %v324 = vadd.f32 %v314, %v322
    %v325 = vtanh.pop %v324
    %327 = vrot.lane.b32.xlu0 %v325, 16
    %v328 = vpop.permute.xlu0 %327
    %v330 = vmul.f32 %v312, %v328
    %332 = vrot.lane.b32.xlu0 %v330, 104
    %v333 = vpop.permute.xlu0 %332
    %s335 = smul.u32 %s224, 2
    %s336 = scalar_lea.vmem %s5, %s335
    %vm337 = vcmask 58368
    %338 = vst.msk [vmem:[%s336] sm:$0x3] %vm337, %v333
  $region33: #{lstm_autoencoder_pallas.1} parent=0 // loop_footer
    %s228 = sadd.s32 1, %s224
  $region34: #{lstm_autoencoder_pallas.1} parent=0 // loop_footer_branch
    %223 = sbr.rel target = $region30
  $region35: #{lstm_autoencoder_pallas.1} parent=0 // loop_exit
    _
  // Predicated region
  $region36: #{lstm_autoencoder_pallas.1} parent=0 // pred_check
    _
  $region37: #{lstm_autoencoder_pallas.1} parent=0 // pred_check_branch
    %340 = sbr.rel (0) target = $region39
  $region38: #{lstm_autoencoder_pallas.1} parent=0 // pred_region
    _
  $region39: #{lstm_autoencoder_pallas.1} parent=0 // pred_fallthru
    _
  // Predicated region
  $region40: #{lstm_autoencoder_pallas.1} parent=0 // pred_check
    _
  $region41: #{lstm_autoencoder_pallas.1} parent=0 // pred_check_branch
    %342 = sbr.rel (0) target = $region43
  $region42: #{lstm_autoencoder_pallas.1} parent=0 // pred_region
    _
  $region43: #{lstm_autoencoder_pallas.1} parent=0 // pred_fallthru
    _

</llo_original>
